<compile_context>
chip_gen: v7x
topology: tpu7x:2x2x1
jax: 0.10.0
libtpu: 0.0.40
codegen_flags: <defaults>
</compile_context>

<pallas_src>
import jax
import jax.numpy as jnp
from jax import lax
from jax.experimental import pallas as pl
from jax.experimental.pallas import tpu as pltpu


_LANE = 128
_CHUNK_R = 128                           # rows per in-kernel accumulation chunk
_TARGET_TILE_BYTES = 4 * 1024 * 1024     # per operand, per pipeline buffer
_VMEM_LIMIT_BYTES = 32 * 1024 * 1024


def _round_up(x: int, m: int) -> int:
    return ((x + m - 1) // m) * m


def _num_parallel_cores() -> int:
    """2-way grid split only on chips with two TensorCores (v7x)."""
    try:
        kind = jax.devices()[0].device_kind.lower()
    except Exception:
        return 1
    return 2 if ("v7" in kind or "7x" in kind) else 1


# ----------------------------------------------------------------------------
# Kernel factory. Grid = (core split, reduction tiles). Per grid step the
# kernel streams a (tile_r, 128) tile through the vreg file in 128-row chunks,
# accumulating sum((p - t)^2) into a resident (8, 128) f32 VMEM scratch block
# (pure VPU adds; no cross-lane work per step). Boundary tiles are row-masked
# in-kernel (no jnp.pad of the operands). At the last reduction step the single
# cross-lane reduce runs on the XLU and the per-core scalar is written out.
# ----------------------------------------------------------------------------
def _make_sq_err_kernel(tile_r, t_per_core, chunk_r, rows_valid, needs_mask):
    n_chunks = tile_r // chunk_r

    def kernel(p_ref, t_ref, o_ref, acc_ref):
        t_idx = pl.program_id(1)

        @pl.when(t_idx == 0)
        def _init():
            acc_ref[...] = jnp.zeros_like(acc_ref)

        row_start = (pl.program_id(0) * t_per_core + t_idx) * tile_r

        def _chunk_sq(g):
            start = pl.multiple_of(g * chunk_r, chunk_r)
            pc = p_ref[pl.ds(start, chunk_r), :].astype(jnp.float32)
            tc = t_ref[pl.ds(start, chunk_r), :].astype(jnp.float32)
            d = pc - tc
            return d * d, start

        def _accum_full(g, acc):
            sq, _ = _chunk_sq(g)
            return acc + sq.reshape(-1, 8, _LANE).sum(axis=0)

        def _accum_masked(g, acc):
            sq, start = _chunk_sq(g)
            rid = (row_start + start
                   + lax.broadcasted_iota(jnp.int32, (chunk_r, _LANE), 0))
            sq = jnp.where(rid < rows_valid, sq, 0.0)
            return acc + sq.reshape(-1, 8, _LANE).sum(axis=0)

        if needs_mask:
            # Interior tiles stay on the cheap mask-free path; only tiles that
            # cross the valid-row boundary (or clamped duplicates) pay for the
            # iota/compare/select.
            @pl.when(row_start + tile_r <= rows_valid)
            def _interior():
                acc_ref[...] = lax.fori_loop(0, n_chunks, _accum_full,
                                             acc_ref[...])

            @pl.when(row_start + tile_r > rows_valid)
            def _boundary():
                acc_ref[...] = lax.fori_loop(0, n_chunks, _accum_masked,
                                             acc_ref[...])
        else:
            acc_ref[...] = lax.fori_loop(0, n_chunks, _accum_full,
                                         acc_ref[...])

        @pl.when(t_idx == pl.num_programs(1) - 1)
        def _finalize():
            # Fused final reduce: one cross-lane sum per core, written as a
            # lane-dense broadcast so the store is a plain unmasked vst.
            s = jnp.sum(acc_ref[...])
            o_ref[...] = jnp.full((1, 1, _LANE), s, dtype=jnp.float32)

    return kernel


def _pallas_sq_err_sum(pred: jax.Array, target: jax.Array) -> jax.Array:
    """Scalar f32 sum((pred - target)^2); any shape, dtypes may differ."""
    assert pred.shape == target.shape, (pred.shape, target.shape)

    p_flat = pred.reshape(-1)      # free for contiguous arrays
    t_flat = target.reshape(-1)
    n = int(p_flat.shape[0])

    item_p = int(jnp.dtype(pred.dtype).itemsize)
    item_t = int(jnp.dtype(target.dtype).itemsize)

    if n % _LANE != 0:
        # TODO(synk): handle the sub-128-element tail on a 1-D trailer in the
        # wrapper instead of this full-copy pad (only hit when n % 128 != 0).
        pad = _LANE - n % _LANE
        p_flat = jnp.pad(p_flat, (0, pad))
        t_flat = jnp.pad(t_flat, (0, pad))

    rows = int(p_flat.shape[0]) // _LANE
    p2 = p_flat.reshape(rows, _LANE)
    t2 = t_flat.reshape(rows, _LANE)

    # sublane multiple required by the narrower dtype (8 f32 / 16 bf16 / 32 i8)
    sub = 8 * max(1, 4 // min(item_p, item_t))
    max_tile_r = max(sub, (_TARGET_TILE_BYTES // (_LANE * max(item_p, item_t)))
                     // sub * sub)

    num_cores = _num_parallel_cores()
    rows_per_core = int(pl.cdiv(rows, num_cores))
    tile_r = min(max_tile_r, _round_up(rows_per_core, sub))
    if tile_r > _CHUNK_R:
        tile_r = (tile_r // _CHUNK_R) * _CHUNK_R      # keep in-kernel chunking exact
    chunk_r = min(_CHUNK_R, tile_r)
    t_per_core = int(pl.cdiv(rows, num_cores * tile_r))
    if num_cores > 1 and (num_cores - 1) * t_per_core * tile_r >= rows:
        num_cores = 1                                  # 2nd core would see no valid rows
        t_per_core = int(pl.cdiv(rows, tile_r))

    covered = num_cores * t_per_core * tile_r
    needs_mask = covered != rows
    max_block = int(pl.cdiv(rows, tile_r)) - 1

    if num_cores == 1:
        in_map = lambda p, t: (t, 0)
    else:
        # Clamp so no DMA block starts fully out of bounds; the in-kernel row
        # mask zeros the contribution of any clamped duplicate tile.
        in_map = lambda p, t: (jnp.minimum(p * t_per_core + t, max_block), 0)

    kernel = _make_sq_err_kernel(tile_r, t_per_core, chunk_r, rows, needs_mask)

    partials = pl.pallas_call(
        kernel,
        out_shape=jax.ShapeDtypeStruct((num_cores, 1, _LANE), jnp.float32),
        grid_spec=pltpu.PrefetchScalarGridSpec(
            num_scalar_prefetch=0,
            grid=(num_cores, t_per_core),
            in_specs=[
                pl.BlockSpec((tile_r, _LANE), in_map),
                pl.BlockSpec((tile_r, _LANE), in_map),
            ],
            out_specs=pl.BlockSpec((1, 1, _LANE), lambda p, t: (p, 0, 0)),
            scratch_shapes=[pltpu.VMEM((8, _LANE), jnp.float32)],
        ),
        compiler_params=pltpu.CompilerParams(
            # TODO(synk): on v7x, verify in a trace that the leading axis is
            # actually sharded across both TensorCores with plain "parallel";
            # if not, switch it to pltpu.CORE_PARALLEL.
            dimension_semantics=("parallel", "arbitrary"),
            vmem_limit_bytes=_VMEM_LIMIT_BYTES,
        ),
        cost_estimate=pl.CostEstimate(
            flops=3 * n,                              # sub + mul + add per element
            transcendentals=0,
            bytes_accessed=n * (item_p + item_t),     # pure-bandwidth kernel
        ),
    )(p2, t2)

    # per-core totals are broadcast across the lane-dense output row; combining
    # <=2 scalars + the /numel fuse into one trivial XLA op.
    return jnp.sum(partials[:, 0, 0])


# ----------------------------------------------------------------------------
# BaseLoss: faithful port of the PyTorch template (no parameters, abstract
# forward). freeze()/requires_grad() are no-ops for a parameter-free module;
# log()/get_config() mirror the original bookkeeping.
# ----------------------------------------------------------------------------
class BaseLoss:
    def __init__(self, name=None):
        self.name = name or self.__class__.__name__
        self._params = {}          # base template holds no parameters
        self._trainable = True

    # exact semantics of the PyTorch base class: abstract forward
    def forward(self, *args, **kwargs):
        raise NotImplementedError("Subclasses must implement the forward method.")

    def __call__(self, *args, **kwargs):
        return self.forward(*args, **kwargs)

    def parameters(self):
        return list(self._params.values())

    def freeze(self):
        self._trainable = False

    def requires_grad(self, mode=True):
        self._trainable = mode
        return self

    def log(self):
        return {"loss_name": self.name,
                "trainable": self._trainable and len(self._params) > 0}

    def get_config(self):
        total = sum(int(p.size) for p in self._params.values())
        return {"name": self.name,
                "trainable_params": total if self._trainable else 0,
                "total_params": total}

    def extra_repr(self):
        return f"name={self.name}"


# Demo concrete subclass using the Pallas hot path (mean squared error),
# showing how the template's forward is meant to be filled in.
class PallasMSELoss(BaseLoss):
    def forward(self, pred, target):
        assert pred.shape == target.shape
        numel = 1
        for s in pred.shape:
            numel *= int(s)
        total = _pallas_sq_err_sum(pred, target)
        return total / jnp.float32(numel)


if __name__ == "__main__":
    key = jax.random.PRNGKey(0)
    k1, k2, k3, k4 = jax.random.split(key, 4)

    # small NCHW-shaped inputs consistent with a typical loss forward
    pred = jax.random.normal(k1, (2, 4, 16, 16), dtype=jnp.float32)
    target = jax.random.normal(k2, (2, 4, 16, 16), dtype=jnp.float32)

    base = BaseLoss(name="base_template")
    # exact base-class contract: forward must raise NotImplementedError
    try:
        base.forward(pred, target)
        raise RuntimeError("BaseLoss.forward should have raised")
    except NotImplementedError:
        pass
    _ = base.log()
    _ = base.get_config()

    loss_fn = PallasMSELoss(name="mse_pallas")
    loss = loss_fn(pred, target)
    jax.block_until_ready(loss)
    ref = jnp.mean((pred - target) ** 2)
    assert jnp.allclose(loss, ref, rtol=1e-5, atol=1e-5), (loss, ref)

    # ragged (non-128-aligned) shape: exercises the masked boundary-tile path
    pred_r = jax.random.normal(k3, (3, 5, 7, 11), dtype=jnp.float32)
    target_r = jax.random.normal(k4, (3, 5, 7, 11), dtype=jnp.float32)
    loss_r = loss_fn(pred_r, target_r)
    jax.block_until_ready(loss_r)
    ref_r = jnp.mean((pred_r - target_r) ** 2)
    assert jnp.allclose(loss_r, ref_r, rtol=1e-5, atol=1e-5), (loss_r, ref_r)

    # TODO(synk): BaseLoss.forward is abstract in the source module; only the
    # template scaffolding + the generic scalar-reduction hot path is lowered.
    print("KERNEL_OK")
</pallas_src>

<mosaic_0001>
module attributes {stable_mosaic.version = 11 : i64} {
  func.func @kernel(%arg0: i32, %arg1: i32, %arg2: memref<16x128xf32, #tpu.memory_space<vmem>>, %arg3: memref<16x128xf32, #tpu.memory_space<vmem>>, %arg4: memref<1x1x128xf32, #tpu.memory_space<vmem>>, %arg5: memref<8x128xf32, #tpu.memory_space<vmem>>) attributes {dimension_semantics = [#tpu.dimension_semantics<parallel>, #tpu.dimension_semantics<arbitrary>], iteration_bounds = array<i64: 1, 1>, scalar_prefetch = 0 : i64, scratch_operands = 1 : i64, tpu.core_type = #tpu.core_type<tc>, window_params = [{transform_indices = @transform_0, window_bounds = array<i64: 16, 128>}, {transform_indices = @transform_1, window_bounds = array<i64: 16, 128>}, {transform_indices = @transform_2, window_bounds = array<i64: 1, 1, 128>}]} {
    %c0_i32 = arith.constant 0 : i32
    %0 = arith.cmpi eq, %arg1, %c0_i32 : i32
    %1 = arith.extui %0 : i1 to i32
    %c0_i32_0 = arith.constant 0 : i32
    %2 = arith.cmpi ne, %1, %c0_i32_0 : i32
    scf.if %2 {
      %cst_9 = arith.constant 0.000000e+00 : f32
      %19 = vector.broadcast %cst_9 : f32 to vector<8x128xf32>
      %c0_10 = arith.constant 0 : index
      %c0_11 = arith.constant 0 : index
      %20 = vector.load %arg5[%c0_10, %c0_11] : memref<8x128xf32, #tpu.memory_space<vmem>>, vector<8x128xf32>
      tpu.vector_store %arg5[%c0_10, %c0_11], %19 {strides = array<i32>} : memref<8x128xf32, #tpu.memory_space<vmem>>, vector<8x128xf32>,
    } else {
    }
    %c0 = arith.constant 0 : index
    %c0_1 = arith.constant 0 : index
    %3 = vector.load %arg5[%c0, %c0_1] : memref<8x128xf32, #tpu.memory_space<vmem>>, vector<8x128xf32>
    %c0_i32_2 = arith.constant 0 : i32
    %c16_i32 = arith.constant 16 : i32
    %4 = arith.muli %c0_i32_2, %c16_i32 : i32
    %5 = tpu.assume_multiple %4, 16 : i32
    %6 = arith.index_cast %5 : i32 to index
    %c0_3 = arith.constant 0 : index
    %7 = vector.load %arg2[%6, %c0_3] : memref<16x128xf32, #tpu.memory_space<vmem>>, vector<16x128xf32>
    %8 = arith.index_cast %5 : i32 to index
    %c0_4 = arith.constant 0 : index
    %9 = vector.load %arg3[%8, %c0_4] : memref<16x128xf32, #tpu.memory_space<vmem>>, vector<16x128xf32>
    %10 = arith.subf %7, %9 : vector<16x128xf32>
    %11 = arith.mulf %10, %10 : vector<16x128xf32>
    %12 = vector.shape_cast %11 : vector<16x128xf32> to vector<2x8x128xf32>
    %cst = arith.constant dense<0.000000e+00> : vector<8x128xf32>
    %13 = vector.multi_reduction <add>, %12, %cst [0] : vector<2x8x128xf32> to vector<8x128xf32>
    %14 = arith.addf %3, %13 : vector<8x128xf32>
    %c1_i32 = arith.constant 1 : i32
    %c0_5 = arith.constant 0 : index
    %c0_6 = arith.constant 0 : index
    %15 = vector.load %arg5[%c0_5, %c0_6] : memref<8x128xf32, #tpu.memory_space<vmem>>, vector<8x128xf32>
    tpu.vector_store %arg5[%c0_5, %c0_6], %14 {strides = array<i32>} : memref<8x128xf32, #tpu.memory_space<vmem>>, vector<8x128xf32>,
    %c0_i32_7 = arith.constant 0 : i32
    %16 = arith.cmpi eq, %arg1, %c0_i32_7 : i32
    %17 = arith.extui %16 : i1 to i32
    %c0_i32_8 = arith.constant 0 : i32
    %18 = arith.cmpi ne, %17, %c0_i32_8 : i32
    scf.if %18 {
      %c0_9 = arith.constant 0 : index
      %c0_10 = arith.constant 0 : index
      %19 = vector.load %arg5[%c0_9, %c0_10] : memref<8x128xf32, #tpu.memory_space<vmem>>, vector<8x128xf32>
      %20 = vector.shape_cast %19 : vector<8x128xf32> to vector<1x8x128xf32>
      %cst_11 = arith.constant dense<0.000000e+00> : vector<1xf32>
      %21 = vector.multi_reduction <add>, %20, %cst_11 [1, 2] : vector<1x8x128xf32> to vector<1xf32>
      %22 = vector.shape_cast %21 : vector<1xf32> to vector<1x1x1xf32>
      %23 = vector.extract %22[0, 0, 0] : f32 from vector<1x1x1xf32>
      %24 = vector.broadcast %23 : f32 to vector<1x1x128xf32>
      %c0_12 = arith.constant 0 : index
      %c0_13 = arith.constant 0 : index
      %c0_14 = arith.constant 0 : index
      %25 = vector.load %arg4[%c0_12, %c0_13, %c0_14] : memref<1x1x128xf32, #tpu.memory_space<vmem>>, vector<1x1x128xf32>
      tpu.vector_store %arg4[%c0_12, %c0_13, %c0_14], %24 {strides = array<i32>} : memref<1x1x128xf32, #tpu.memory_space<vmem>>, vector<1x1x128xf32>,
    } else {
    }
    return
  }
  func.func @transform_0(%arg0: i32, %arg1: i32) -> (i32, i32) {
    %c0_i32 = arith.constant 0 : i32
    %c0_i32_0 = arith.constant 0 : i32
    return %arg1, %c0_i32 : i32, i32
  }
  func.func @transform_1(%arg0: i32, %arg1: i32) -> (i32, i32) {
    %c0_i32 = arith.constant 0 : i32
    %c0_i32_0 = arith.constant 0 : i32
    return %arg1, %c0_i32 : i32, i32
  }
  func.func @transform_2(%arg0: i32, %arg1: i32) -> (i32, i32, i32) {
    %c0_i32 = arith.constant 0 : i32
    %c0_i32_0 = arith.constant 0 : i32
    %c0_i32_1 = arith.constant 0 : i32
    return %arg0, %c0_i32, %c0_i32_0 : i32, i32, i32
  }
}

</mosaic_0001>

<llo_original>
// kernel: tpu_custom_call.1
$region0: #{tpu_custom_call.1}
  #allocation0 [shape = 'u32[]', space=smem, size = 0x4, offset = 0x4, fixed_abs, tag = 'smem constant byte address 0x4 - core index']
  #allocation1 [shape = 'u32[144,128]{1,0:T(1,128)}', space=vmem, size = 0x12000, scoped, tag = 'internal scratch']
  #allocation2 [shape = 'f32[8,128]{1,0:T(8,128)}', space=vmem, size = 0x1000, scoped, tag = 'scratch operand']
  %s0 = inlined_call_operand.hbm [shape: f32[16,128], index: 0, kind: input, shape index: {}]
  %s1 = inlined_call_operand.hbm [shape: f32[16,128], index: 1, kind: input, shape index: {}]
  %s2 = inlined_call_operand.hbm [shape: f32[1,1,128], index: 2, kind: output, shape index: {}]
  %s3 = sld [smem:[#allocation0]]
  $region34: #{tpu_custom_call.1} parent=0
    _
  %s5 = ssub.s32 1, %s3
  %s6 = scalar_select 0, %s5, %s3
  $region1: #{tpu_custom_call.1} parent=0
    #allocation3 [shape = 'u8[8192]{0}', space=vmem, size = 0x2000, scoped, tag = 'input window, operand 0, single buffered']
    #allocation4 [shape = 's32[1]{0}', space=sflag, size = 0x4, scoped, tag = 'scoped memory for tpu_custom_call.1']
    #allocation5 [shape = 's32[1]{0}', space=sflag, size = 0x4, scoped, tag = 'scoped memory for tpu_custom_call.1']
    #allocation6 [shape = 'u8[8192]{0}', space=vmem, size = 0x2000, scoped, tag = 'input window, operand 1, single buffered']
    #allocation7 [shape = 's32[1]{0}', space=sflag, size = 0x4, scoped, tag = 'scoped memory for tpu_custom_call.1']
    #allocation8 [shape = 'u8[512]{0}', space=vmem, size = 0x400, scoped, tag = 'output window, operand 0, single buffered']
    %7 = vsyncpa [#allocation4], 0
    %8 = vsyncpa [#allocation7], 0
    %9 = vsyncpa [#allocation5], 0
    // Predicated region
    $region2: #{tpu_custom_call.1} parent=1 // pred_check
      _
    $region3: #{tpu_custom_call.1} parent=1 // pred_check_branch
      %11 = sbr.rel (0) target = $region5
    $region4: #{tpu_custom_call.1} parent=1 // pred_region
      %s13 = ssub.s32 256, 256
      %14 = vsyncadd [#allocation4], %s13
      %s15 = sshll.u32 [#allocation3], 4
      %s16 = int_to_ptr.vmem [resolvable:$true] %s15
      %21 = dma.hbm_to_vmem [thread:$0]  %s0, 256, %s16, [#allocation4], 128, 128, 8
    $region5: #{tpu_custom_call.1} parent=1 // pred_fallthru
      _
    // Predicated region
    $region6: #{tpu_custom_call.1} parent=1 // pred_check
      _
    $region7: #{tpu_custom_call.1} parent=1 // pred_check_branch
      %23 = sbr.rel (0) target = $region9
    $region8: #{tpu_custom_call.1} parent=1 // pred_region
      %s25 = ssub.s32 256, 256
      %26 = vsyncadd [#allocation7], %s25
      %s27 = sshll.u32 [#allocation6], 4
      %s28 = int_to_ptr.vmem [resolvable:$true] %s27
      %33 = dma.hbm_to_vmem [thread:$0]  %s1, 256, %s28, [#allocation7], 128, 128, 8
    $region9: #{tpu_custom_call.1} parent=1 // pred_fallthru
      _
    // Predicated region
    $region10: #{tpu_custom_call.1} parent=1 // pred_check
      _
    $region11: #{tpu_custom_call.1} parent=1 // pred_check_branch
      %35 = sbr.rel (0) target = $region13
    $region12: #{tpu_custom_call.1} parent=1 // pred_region
      %36 = dma.done [#allocation4], 256
    $region13: #{tpu_custom_call.1} parent=1 // pred_fallthru
      _
    // Predicated region
    $region14: #{tpu_custom_call.1} parent=1 // pred_check
      _
    $region15: #{tpu_custom_call.1} parent=1 // pred_check_branch
      %38 = sbr.rel (0) target = $region17
    $region16: #{tpu_custom_call.1} parent=1 // pred_region
      %39 = dma.done [#allocation7], 256
    $region17: #{tpu_custom_call.1} parent=1 // pred_fallthru
      _
    %p40 = scmp.eq.s32.totalorder 0, 0
    // Predicated region
    $region18: #{tpu_custom_call.1} parent=1 // pred_check
      %p41 = pneg %p40
    $region19: #{tpu_custom_call.1} parent=1 // pred_check_branch
      %43 = sbr.rel (%p41) target = $region21
    $region20: #{tpu_custom_call.1} parent=1 // pred_region
      %44 = vst [vmem:[#allocation2] sm:$0xff] 0.0
    $region21: #{tpu_custom_call.1} parent=1 // pred_fallthru
      _
    %v45 = vld [vmem:[#allocation2] sm:$0xff]
    %v46 = vld [vmem:[#allocation3] sm:$0xff]
    %v47 = vld [vmem:[#allocation3 + $0x8] sm:$0xff]
    %v48 = vld [vmem:[#allocation6] sm:$0xff]
    %v49 = vld [vmem:[#allocation6 + $0x8] sm:$0xff]
    %v50 = vsub.f32 %v46, %v48
    %v51 = vsub.f32 %v47, %v49
    %v52 = vmul.f32 %v50, %v50
    %v53 = vmul.f32 %v51, %v51
    %v54 = vadd.f32 %v52, %v53
    %v55 = vadd.f32 %v45, %v54
    %56 = vst [vmem:[#allocation2] sm:$0xff] %v55
    // Predicated region
    $region22: #{tpu_custom_call.1} parent=1 // pred_check
      %p57 = pneg %p40
    $region23: #{tpu_custom_call.1} parent=1 // pred_check_branch
      %59 = sbr.rel (%p57) target = $region25
    $region24: #{tpu_custom_call.1} parent=1 // pred_region
      %v60 = vld [vmem:[#allocation2] sm:$0xff]
      %61 = vadd.xlane.f32.xlu0 %v60
      %v62 = vpop.xlane.xlu0 %61
      %v63 = vrot.slane %v62, 4
      %v64 = vadd.f32 %v62, %v63
      %v65 = vrot.slane %v64, 2
      %v66 = vadd.f32 %v64, %v65
      %v67 = vrot.slane %v66, 1
      %v68 = vadd.f32 %v66, %v67
      %s69 = vtos %v68
      %v70 = vstv %s69
      %71 = vst [vmem:[#allocation8] sm:$0x1] %v70
    $region25: #{tpu_custom_call.1} parent=1 // pred_fallthru
      _
    // Predicated region
    $region26: #{tpu_custom_call.1} parent=1 // pred_check
      _
    $region27: #{tpu_custom_call.1} parent=1 // pred_check_branch
      %73 = sbr.rel (0) target = $region29
    $region28: #{tpu_custom_call.1} parent=1 // pred_region
      %s75 = ssub.s32 16, 16
      %76 = vsyncadd [#allocation5], %s75
      %s78 = sshll.u32 [#allocation8], 4
      %s79 = int_to_ptr.vmem [resolvable:$true] %s78
      %81 = dma.vmem_to_hbm [thread:$0]  %s79, 16, %s2, [#allocation5]
    $region29: #{tpu_custom_call.1} parent=1 // pred_fallthru
      _
    // Predicated region
    $region30: #{tpu_custom_call.1} parent=1 // pred_check
      _
    $region31: #{tpu_custom_call.1} parent=1 // pred_check_branch
      %83 = sbr.rel (0) target = $region33
    $region32: #{tpu_custom_call.1} parent=1 // pred_region
      %84 = dma.done [#allocation5], 16
    $region33: #{tpu_custom_call.1} parent=1 // pred_fallthru
      _
    %85 = vsyncpa [#allocation4], 1
    %86 = vsyncpa [#allocation7], 1
    %87 = vsyncpa [#allocation5], 1

</llo_original>
